<compile_context>
chip_gen: v5e
topology: v5e:2x2
jax: 0.10.0
libtpu: 0.0.40
codegen_flags: <defaults>
</compile_context>

<pallas_src>
import jax
import jax.numpy as jnp
from jax.experimental import pallas as pl
from jax.experimental.pallas import tpu as pltpu


_MIB = 1024 * 1024


# ------------------------------ helpers -------------------------------------

def _vmem_budget_bytes():
    """Generation-aware scoped-VMEM limit (~96 MiB v5e/v6e, ~48 MiB v7x)."""
    cap = 64 * _MIB  # conservative default (v7x physical per-TC VMEM)
    try:
        cap = int(pltpu.get_tpu_info().vmem_capacity_bytes)
    except Exception:
        pass
    return int(min(3 * cap // 4, cap - 16 * _MIB))


def _sublane_align(dtype):
    itemsize = jnp.dtype(dtype).itemsize
    if itemsize >= 4:
        return 8
    if itemsize == 2:
        return 16
    return 32


def _padded_tile_bytes(rows, cols, dtype):
    """VMEM bytes of a (rows, cols) tile after (sublane, 128)-lane padding."""
    sub = _sublane_align(dtype)
    prows = -(-rows // sub) * sub
    pcols = -(-cols // 128) * 128
    return prows * pcols * jnp.dtype(dtype).itemsize


def _buffered_spec(block_shape, index_map, nbuf):
    """BlockSpec with optional multi-buffering; degrades gracefully."""
    if nbuf is not None and hasattr(pl, "Buffered"):
        try:
            return pl.BlockSpec(block_shape, index_map,
                                pipeline_mode=pl.Buffered(nbuf))
        except TypeError:
            pass
    return pl.BlockSpec(block_shape, index_map)


def _cost_estimate(B, M, N, D, x2, x3, out_dtype):
    bytes_accessed = (x3.size * x3.dtype.itemsize
                      + x2.size * x2.dtype.itemsize
                      + B * M * D * jnp.dtype(out_dtype).itemsize)
    return pl.CostEstimate(flops=2 * B * M * N * D,
                           transcendentals=0,
                           bytes_accessed=bytes_accessed)


# ------------------------- small path (per-batch step) ----------------------

def _small_kernel(x3_ref, x2_ref, out_ref):
    # out[b] = x3[b] @ x2[b]; one batch per grid step (parallel across TCs).
    out_ref[0] = jnp.dot(
        x3_ref[0], x2_ref[0], preferred_element_type=jnp.float32
    ).astype(out_ref.dtype)


def _small_call(x2, x3, out_dtype, vmem_limit, cost):
    B, N, D = x2.shape
    _, M, _ = x3.shape
    return pl.pallas_call(
        _small_kernel,
        out_shape=jax.ShapeDtypeStruct((B, M, D), out_dtype),
        grid_spec=pltpu.PrefetchScalarGridSpec(
            num_scalar_prefetch=0,
            grid=(B,),
            in_specs=[
                pl.BlockSpec((1, M, N), lambda b: (b, 0, 0)),
                pl.BlockSpec((1, N, D), lambda b: (b, 0, 0)),
            ],
            out_specs=pl.BlockSpec((1, M, D), lambda b: (b, 0, 0)),
        ),
        compiler_params=pltpu.CompilerParams(
            dimension_semantics=("parallel",),
            vmem_limit_bytes=vmem_limit,
        ),
        cost_estimate=cost,
    )(x3, x2)


def _small_footprint_bytes(M, N, D, x2_dtype, x3_dtype, out_dtype):
    # Per-batch blocks, double-buffered, (sublane,128)-padding aware.
    return 2 * (_padded_tile_bytes(M, N, x3_dtype)
                + _padded_tile_bytes(N, D, x2_dtype)
                + _padded_tile_bytes(M, D, out_dtype))


# ------------------------- tiled path (large shapes) ------------------------

def _tiled_kernel_f32(x3_ref, x2_ref, out_ref):
    # f32 output: accumulate directly into the resident output block.
    @pl.when(pl.program_id(3) == 0)
    def _():
        out_ref[...] = jnp.zeros_like(out_ref)

    out_ref[0] += jnp.dot(
        x3_ref[0], x2_ref[0], preferred_element_type=jnp.float32
    )


def _tiled_kernel_acc(x3_ref, x2_ref, out_ref, acc_ref):
    # Narrow output dtype: keep a float32 VMEM accumulator for precision.
    @pl.when(pl.program_id(3) == 0)
    def _():
        acc_ref[...] = jnp.zeros_like(acc_ref)

    acc_ref[...] += jnp.dot(
        x3_ref[0], x2_ref[0], preferred_element_type=jnp.float32
    )

    @pl.when(pl.program_id(3) == pl.num_programs(3) - 1)
    def _():
        out_ref[0] = acc_ref[...].astype(out_ref.dtype)


def _pick_tile(dim, target, align):
    """Largest multiple of `align` dividing `dim`, <= target; else full dim."""
    if dim % align != 0:
        return dim
    t = min(target, dim)
    t -= t % align
    while t >= align:
        if dim % t == 0:
            return t
        t -= align
    return dim


def _tile_footprint_bytes(tm, tk, td, x3_dt, x2_dt, out_dt, use_acc, in_bufs):
    f = in_bufs * (_padded_tile_bytes(tm, tk, x3_dt)
                   + _padded_tile_bytes(tk, td, x2_dt))
    f += 2 * _padded_tile_bytes(tm, td, out_dt)
    if use_acc:
        f += _padded_tile_bytes(tm, td, jnp.float32)
    return f


def _tiled_call(x2, x3, out_dtype, vmem_limit, cost):
    B, N, D = x2.shape
    _, M, _ = x3.shape
    use_acc = jnp.dtype(out_dtype) != jnp.dtype(jnp.float32)
    m_align = _sublane_align(x3.dtype)
    max_in_bufs = 3  # extra input buffer to hide DMA latency (mem-bound kernel)

    # Try progressively smaller tile targets until the multi-buffered,
    # padding-aware VMEM footprint fits the generation-aware budget.  This
    # guards _pick_tile's full-dim fallback against blowing v7x's 64 MiB VMEM.
    budget = max(vmem_limit - 2 * _MIB, _MIB)
    chosen = None
    for (mt, kt, dt) in ((512, 512, 1024), (256, 512, 512), (256, 256, 512),
                         (128, 256, 256), (128, 128, 128)):
        tm = _pick_tile(M, mt, m_align)
        tk = _pick_tile(N, kt, 128)
        td = _pick_tile(D, dt, 128)
        if _tile_footprint_bytes(tm, tk, td, x3.dtype, x2.dtype, out_dtype,
                                 use_acc, max_in_bufs) <= budget:
            chosen = (tm, tk, td)
            break
    if chosen is None:
        # TODO(synk): pad/mask ragged dims instead of full-dim tile fallback.
        raise ValueError(
            f"tile selection exceeds the VMEM budget for M={M}, N={N}, D={D}")
    tm, tk, td = chosen
    grid = (B, M // tm, D // td, N // tk)

    # Only request a 3-deep input pipeline when there are enough grid steps to
    # benefit; otherwise keep the default (and well-tested) double buffering.
    n_steps = B * (M // tm) * (D // td) * (N // tk)
    in_bufs = max_in_bufs if n_steps >= 3 else None

    in_specs = [
        _buffered_spec((1, tm, tk), lambda b, i, j, k: (b, i, k), in_bufs),
        _buffered_spec((1, tk, td), lambda b, i, j, k: (b, k, j), in_bufs),
    ]
    out_spec = pl.BlockSpec((1, tm, td), lambda b, i, j, k: (b, i, j))
    if use_acc:
        kernel = _tiled_kernel_acc
        scratch = [pltpu.VMEM((tm, td), jnp.float32)]
    else:
        kernel = _tiled_kernel_f32
        scratch = []

    return pl.pallas_call(
        kernel,
        out_shape=jax.ShapeDtypeStruct((B, M, D), out_dtype),
        grid_spec=pltpu.PrefetchScalarGridSpec(
            num_scalar_prefetch=0,
            grid=grid,
            in_specs=in_specs,
            out_specs=out_spec,
            scratch_shapes=scratch,
        ),
        compiler_params=pltpu.CompilerParams(
            dimension_semantics=("parallel", "parallel", "parallel",
                                 "arbitrary"),
            vmem_limit_bytes=vmem_limit,
        ),
        cost_estimate=cost,
    )(x3, x2)


# --------------------------------- wrapper ----------------------------------

def model_forward(x1, x2, x3):
    """Matches the PyTorch module's returned value: x3 @ x2.

    The qk = x1 @ x2^T / sqrt(d) + x3 and softmax branch is dead code in the
    original forward (its result is never used), so it is not computed and x1
    is never DMA'd into the kernel.
    """
    del x1  # dead input (only feeds the dead attention branch)
    B, N, D = x2.shape
    Bx, M, Nx = x3.shape
    assert (Bx, Nx) == (B, N), "x3 must be (B, M, N) with x2 = (B, N, D)"
    out_dtype = jnp.result_type(x3.dtype, x2.dtype)

    vmem_limit = _vmem_budget_bytes()
    cost = _cost_estimate(B, M, N, D, x2, x3, out_dtype)

    if _small_footprint_bytes(M, N, D, x2.dtype, x3.dtype,
                              out_dtype) <= vmem_limit:
        return _small_call(x2, x3, out_dtype, vmem_limit, cost)
    return _tiled_call(x2, x3, out_dtype, vmem_limit, cost)


# ---------------------------------- main ------------------------------------

if __name__ == "__main__":
    # Small, self-consistent attention-like shapes:
    #   x1: (B, M, D), x2: (B, N, D), x3: (B, M, N)
    B, M, N, D = 2, 8, 16, 32
    key = jax.random.PRNGKey(0)
    k1, k2, k3 = jax.random.split(key, 3)
    x1 = jax.random.normal(k1, (B, M, D), dtype=jnp.float32)
    x2 = jax.random.normal(k2, (B, N, D), dtype=jnp.float32)
    x3 = jax.random.normal(k3, (B, M, N), dtype=jnp.float32)

    ref = jnp.matmul(x3, x2)

    # Default (adaptive) path — small shapes take the per-batch fast path.
    out = jax.block_until_ready(model_forward(x1, x2, x3))
    assert out.shape == (B, M, D)
    assert jnp.allclose(out, ref, atol=1e-4, rtol=1e-4)

    vmem_limit = _vmem_budget_bytes()
    cost = _cost_estimate(B, M, N, D, x2, x3, jnp.float32)

    # Exercise the tiled path with f32 output (direct output accumulation).
    out_tiled = jax.block_until_ready(
        _tiled_call(x2, x3, jnp.float32, vmem_limit, cost))
    assert jnp.allclose(out_tiled, ref, atol=1e-4, rtol=1e-4)

    # Exercise the tiled path with bf16 output (f32 scratch accumulator).
    x2b = x2.astype(jnp.bfloat16)
    x3b = x3.astype(jnp.bfloat16)
    ref_bf = jnp.matmul(x3b, x2b).astype(jnp.float32)
    out_bf = jax.block_until_ready(
        _tiled_call(x2b, x3b, jnp.bfloat16, vmem_limit,
                    _cost_estimate(B, M, N, D, x2b, x3b, jnp.bfloat16)))
    assert jnp.allclose(out_bf.astype(jnp.float32), ref_bf,
                        atol=1e-1, rtol=5e-2)

    print("KERNEL_OK")
</pallas_src>

<mosaic_0001>
module attributes {stable_mosaic.version = 11 : i64} {
  func.func @_small_kernel(%arg0: i32, %arg1: memref<1x8x16xf32, #tpu.memory_space<vmem>>, %arg2: memref<1x16x32xf32, #tpu.memory_space<vmem>>, %arg3: memref<1x8x32xf32, #tpu.memory_space<vmem>>) attributes {dimension_semantics = [#tpu.dimension_semantics<parallel>], iteration_bounds = array<i64: 2>, scalar_prefetch = 0 : i64, scratch_operands = 0 : i64, tpu.core_type = #tpu.core_type<tc>, window_params = [{transform_indices = @transform_0, window_bounds = array<i64: 1, 8, 16>}, {transform_indices = @transform_1, window_bounds = array<i64: 1, 16, 32>}, {transform_indices = @transform_2, window_bounds = array<i64: 1, 8, 32>}]} {
    %c0 = arith.constant 0 : index
    %c0_0 = arith.constant 0 : index
    %c0_1 = arith.constant 0 : index
    %0 = vector.load %arg1[%c0, %c0_0, %c0_1] : memref<1x8x16xf32, #tpu.memory_space<vmem>>, vector<1x8x16xf32>
    %1 = vector.shape_cast %0 : vector<1x8x16xf32> to vector<8x16xf32>
    %c0_2 = arith.constant 0 : index
    %c0_3 = arith.constant 0 : index
    %c0_4 = arith.constant 0 : index
    %2 = vector.load %arg2[%c0_2, %c0_3, %c0_4] : memref<1x16x32xf32, #tpu.memory_space<vmem>>, vector<1x16x32xf32>
    %3 = vector.shape_cast %2 : vector<1x16x32xf32> to vector<16x32xf32>
    %cst = arith.constant dense<0.000000e+00> : vector<8x32xf32>
    %4 = tpu.matmul %1, %3, %cst {dimension_numbers = #tpu.dot_dimension_numbers<[1], [0], [0], [1], [0, 0, 1, 1], [], []>} : vector<8x16xf32>, vector<16x32xf32>, vector<8x32xf32> -> vector<8x32xf32>
    %c0_5 = arith.constant 0 : index
    %c0_6 = arith.constant 0 : index
    %c0_7 = arith.constant 0 : index
    %5 = vector.load %arg3[%c0_5, %c0_6, %c0_7] : memref<1x8x32xf32, #tpu.memory_space<vmem>>, vector<1x8x32xf32>
    %6 = vector.shape_cast %5 : vector<1x8x32xf32> to vector<8x32xf32>
    %7 = vector.shape_cast %4 : vector<8x32xf32> to vector<1x8x32xf32>
    tpu.vector_store %arg3[%c0_5, %c0_6, %c0_7], %7 {strides = array<i32>} : memref<1x8x32xf32, #tpu.memory_space<vmem>>, vector<1x8x32xf32>,
    return
  }
  func.func @transform_0(%arg0: i32) -> (i32, i32, i32) {
    %c0_i32 = arith.constant 0 : i32
    %c0_i32_0 = arith.constant 0 : i32
    %c0_i32_1 = arith.constant 0 : i32
    return %arg0, %c0_i32, %c0_i32_0 : i32, i32, i32
  }
  func.func @transform_1(%arg0: i32) -> (i32, i32, i32) {
    %c0_i32 = arith.constant 0 : i32
    %c0_i32_0 = arith.constant 0 : i32
    %c0_i32_1 = arith.constant 0 : i32
    return %arg0, %c0_i32, %c0_i32_0 : i32, i32, i32
  }
  func.func @transform_2(%arg0: i32) -> (i32, i32, i32) {
    %c0_i32 = arith.constant 0 : i32
    %c0_i32_0 = arith.constant 0 : i32
    %c0_i32_1 = arith.constant 0 : i32
    return %arg0, %c0_i32, %c0_i32_0 : i32, i32, i32
  }
}

</mosaic_0001>

<llo_original>
// kernel: tpu_custom_call.1
$region0: #{tpu_custom_call.1}
  #allocation0 [shape = 'u32[]', space=smem, size = 0x4, offset = 0x4, fixed_abs, tag = 'smem constant byte address 0x4 - core index']
  #allocation1 [shape = 'u32[72,128]{1,0:T(1,128)}', space=vmem, size = 0x9000, scoped, tag = 'internal scratch']
  %s0 = inlined_call_operand.hbm [shape: f32[2,8,16], index: 0, kind: input, shape index: {}]
  %s1 = inlined_call_operand.hbm [shape: f32[2,16,32], index: 1, kind: input, shape index: {}]
  %s2 = inlined_call_operand.hbm [shape: f32[2,8,32], index: 2, kind: output, shape index: {}]
  %s3 = sld [smem:[#allocation0]]
  $region49: #{tpu_custom_call.1} parent=0
    _
  %s5 = ssub.s32 1, %s3
  %s6 = scalar_select 0, %s5, %s3
  $region1: #{tpu_custom_call.1} parent=0
    #allocation2 [shape = 'u8[8192]{0}', space=vmem, size = 0x2000, scoped, tag = 'input window, operand 0']
    #allocation3 [shape = 's32[2]{0}', space=sflag, size = 0x8, scoped, tag = 'scoped memory for tpu_custom_call.1']
    #allocation4 [shape = 's32[2]{0}', space=sflag, size = 0x8, scoped, tag = 'scoped memory for tpu_custom_call.1']
    #allocation5 [shape = 'u8[16384]{0}', space=vmem, size = 0x4000, scoped, tag = 'input window, operand 1']
    #allocation6 [shape = 's32[2]{0}', space=sflag, size = 0x8, scoped, tag = 'scoped memory for tpu_custom_call.1']
    #allocation7 [shape = 'u8[8192]{0}', space=vmem, size = 0x2000, scoped, tag = 'output window, operand 0']
    %7 = vsyncpa [#allocation3], 0
    %s8 = scalar_lea.sflag [#allocation3], 1
    %9 = vsyncpa %s8, 0
    %10 = vsyncpa [#allocation6], 0
    %s11 = scalar_lea.sflag [#allocation6], 1
    %12 = vsyncpa %s11, 0
    %13 = vsyncpa [#allocation4], 0
    %s14 = scalar_lea.sflag [#allocation4], 1
    %15 = vsyncpa %s14, 0
    loop: start=0, step=1, limit=4
    $region2: #{tpu_custom_call.1} parent=1 // loop_pre_header
      _
    $region3: #{tpu_custom_call.1} parent=1 // loop_header
      %s17 = sphi 0, %s21
      %p18 = scmp.ge.s32.totalorder %s17, 4
      %s27 = sphi 0, %s29
      %s30 = sphi 0, %s27
      %s31 = sphi 0, %s30
      %s47 = sphi 0, %s31
      %s53 = sphi 0, %s55
      %s56 = sphi 0, %s53
      %s57 = sphi 0, %s56
      %s73 = sphi 0, %s57
      %s79 = sphi 0, %s81
      %s82 = sphi 0, %s79
      %s83 = sphi 0, %s82
      %s99 = sphi 0, %s83
    $region4: #{tpu_custom_call.1} parent=1 // loop_header_branch
      %20 = sbr.rel (%p18) target = $region8
    $region5: #{tpu_custom_call.1} parent=1 // loop_body
      %s22 = ssub.s32 %s17, 1
      %s23 = ssub.s32 %s17, 2
      %s24 = sadd.s32 %s17, 1
      %s25 = ssub.s32 %s17, %s24
      %p26 = scmp.eq.s32.totalorder %s25, 0
      %s28 = sadd.s32 %s27, 1
      %s29 = scalar_select %p26, %s27, %s28
      %p32 = pneg %p26
      %p33 = scmp.eq.s32.totalorder %s17, 1
      %p34 = por %p32, %p33
      %p35 = scmp.ne.s32.totalorder %s27, %s30
      %p36 = scmp.eq.s32.totalorder %s17, 0
      %p37 = por %p35, %p36
      %p38 = scmp.ne.s32.totalorder %s27, %s30
      %p39 = scmp.eq.s32.totalorder %s22, 1
      %p40 = por %p38, %p39
      %p41 = scmp.ne.s32.totalorder %s30, %s31
      %p42 = scmp.eq.s32.totalorder %s22, 0
      %p43 = por %p41, %p42
      %p44 = scmp.ne.s32.totalorder %s30, %s31
      %p45 = scmp.eq.s32.totalorder %s23, 1
      %p46 = por %p44, %p45
      %p48 = scmp.ne.s32.totalorder %s31, %s47
      %p49 = scmp.eq.s32.totalorder %s23, 0
      %p50 = por %p48, %p49
      %s51 = ssub.s32 %s17, %s24
      %p52 = scmp.eq.s32.totalorder %s51, 0
      %s54 = sadd.s32 %s53, 1
      %s55 = scalar_select %p52, %s53, %s54
      %p58 = pneg %p52
      %p59 = scmp.eq.s32.totalorder %s17, 1
      %p60 = por %p58, %p59
      %p61 = scmp.ne.s32.totalorder %s53, %s56
      %p62 = scmp.eq.s32.totalorder %s17, 0
      %p63 = por %p61, %p62
      %p64 = scmp.ne.s32.totalorder %s53, %s56
      %p65 = scmp.eq.s32.totalorder %s22, 1
      %p66 = por %p64, %p65
      %p67 = scmp.ne.s32.totalorder %s56, %s57
      %p68 = scmp.eq.s32.totalorder %s22, 0
      %p69 = por %p67, %p68
      %p70 = scmp.ne.s32.totalorder %s56, %s57
      %p71 = scmp.eq.s32.totalorder %s23, 1
      %p72 = por %p70, %p71
      %p74 = scmp.ne.s32.totalorder %s57, %s73
      %p75 = scmp.eq.s32.totalorder %s23, 0
      %p76 = por %p74, %p75
      %s77 = ssub.s32 %s17, %s24
      %p78 = scmp.eq.s32.totalorder %s77, 0
      %s80 = sadd.s32 %s79, 1
      %s81 = scalar_select %p78, %s79, %s80
      %p84 = pneg %p78
      %p85 = scmp.eq.s32.totalorder %s17, 1
      %p86 = por %p84, %p85
      %p87 = scmp.ne.s32.totalorder %s79, %s82
      %p88 = scmp.eq.s32.totalorder %s17, 0
      %p89 = por %p87, %p88
      %p90 = scmp.ne.s32.totalorder %s79, %s82
      %p91 = scmp.eq.s32.totalorder %s22, 1
      %p92 = por %p90, %p91
      %p93 = scmp.ne.s32.totalorder %s82, %s83
      %p94 = scmp.eq.s32.totalorder %s22, 0
      %p95 = por %p93, %p94
      %p96 = scmp.ne.s32.totalorder %s82, %s83
      %p97 = scmp.eq.s32.totalorder %s23, 1
      %p98 = por %p96, %p97
      %p100 = scmp.ne.s32.totalorder %s83, %s99
      %p101 = scmp.eq.s32.totalorder %s23, 0
      %p102 = por %p100, %p101
      %p103 = scmp.le.s32.totalorder 1, %s17
      %p104 = scmp.lt.s32.totalorder %s17, 3
      %p105 = pnand %p103, %p104
      %p106 = pneg %p105
      // Predicated region
      $region9: #{tpu_custom_call.1} parent=5 // pred_check
        _
      $region10: #{tpu_custom_call.1} parent=5 // pred_check_branch
        %108 = sbr.rel (%p105) target = $region12
      $region11: #{tpu_custom_call.1} parent=5 // pred_region
        %s109 = ssub.s32 %s17, 1
      $region12: #{tpu_custom_call.1} parent=5 // pred_fallthru
        _
      %p110 = scmp.lt.s32.totalorder %s17, 2
      // Predicated region
      $region13: #{tpu_custom_call.1} parent=5 // pred_check
        %p111 = pneg %p110
      $region14: #{tpu_custom_call.1} parent=5 // pred_check_branch
        %113 = sbr.rel (%p111) target = $region16
      $region15: #{tpu_custom_call.1} parent=5 // pred_region
        // Predicated region
        $region17: #{tpu_custom_call.1} parent=15 // pred_check
          %p114 = pneg %p37
        $region18: #{tpu_custom_call.1} parent=15 // pred_check_branch
          %116 = sbr.rel (%p114) target = $region20
        $region19: #{tpu_custom_call.1} parent=15 // pred_region
          %s117 = sand.u32 %s27, 1
          %s118 = scalar_lea.sflag [#allocation3], %s117
          %s119 = sand.u32 %s27, 1
          %s120 = smul.addr %s119, 8
          %s121 = scalar_lea.vmem [#allocation2], %s120
          %123 = vsyncadd %s118, 0
          %s124 = smul.addr %s17, 8
          %s125 = scalar_lea.hbm %s0, %s124
          %s127 = sshll.u32 %s125, 4
          %s128 = int_to_ptr.hbm [resolvable:$true] %s127
          %s129 = sshll.u32 %s121, 4
          %s130 = int_to_ptr.vmem [resolvable:$true] %s129
          %132 = dma.hbm_to_vmem [thread:$0]  %s128, 128, %s130, %s118
        $region20: #{tpu_custom_call.1} parent=15 // pred_fallthru
          _
        // Predicated region
        $region21: #{tpu_custom_call.1} parent=15 // pred_check
          %p133 = pneg %p63
        $region22: #{tpu_custom_call.1} parent=15 // pred_check_branch
          %135 = sbr.rel (%p133) target = $region24
        $region23: #{tpu_custom_call.1} parent=15 // pred_region
          %s136 = sand.u32 %s53, 1
          %s137 = scalar_lea.sflag [#allocation6], %s136
          %s138 = sand.u32 %s53, 1
          %s139 = smul.addr %s138, 16
          %s140 = scalar_lea.vmem [#allocation5], %s139
          %142 = vsyncadd %s137, 0
          %s143 = smul.addr %s17, 2
          %s144 = smul.addr %s143, 8
          %s145 = scalar_lea.hbm %s1, %s144
          %s146 = sshll.u32 %s145, 4
          %s147 = int_to_ptr.hbm [resolvable:$true] %s146
          %s148 = sshll.u32 %s140, 4
          %s149 = int_to_ptr.vmem [resolvable:$true] %s148
          %154 = dma.hbm_to_vmem [thread:$0]  %s147, 256, %s149, %s137, 128, 128, 8
        $region24: #{tpu_custom_call.1} parent=15 // pred_fallthru
          _
      $region16: #{tpu_custom_call.1} parent=5 // pred_fallthru
        _
      %p155 = scmp.le.s32.totalorder 1, %s17
      %p156 = scmp.lt.s32.totalorder %s17, 3
      %p157 = pnand %p155, %p156
      %p158 = pneg %p157
      // Predicated region
      $region25: #{tpu_custom_call.1} parent=5 // pred_check
        _
      $region26: #{tpu_custom_call.1} parent=5 // pred_check_branch
        %160 = sbr.rel (%p157) target = $region28
      $region27: #{tpu_custom_call.1} parent=5 // pred_region
        %s161 = ssub.s32 %s17, 1
        %s162 = sand.u32 %s30, 1
        %s163 = scalar_lea.sflag [#allocation3], %s162
        %s164 = sand.u32 %s30, 1
        %s165 = smul.addr %s164, 8
        %s166 = scalar_lea.vmem [#allocation2], %s165
        // Predicated region
        $region29: #{tpu_custom_call.1} parent=27 // pred_check
          %p167 = pneg %p43
        $region30: #{tpu_custom_call.1} parent=27 // pred_check_branch
          %169 = sbr.rel (%p167) target = $region32
        $region31: #{tpu_custom_call.1} parent=27 // pred_region
          %171 = dma.done %s163, 128
        $region32: #{tpu_custom_call.1} parent=27 // pred_fallthru
          _
        %s172 = sand.u32 %s56, 1
        %s173 = scalar_lea.sflag [#allocation6], %s172
        %s174 = sand.u32 %s56, 1
        %s175 = smul.addr %s174, 16
        %s176 = scalar_lea.vmem [#allocation5], %s175
        // Predicated region
        $region33: #{tpu_custom_call.1} parent=27 // pred_check
          %p177 = pneg %p69
        $region34: #{tpu_custom_call.1} parent=27 // pred_check_branch
          %179 = sbr.rel (%p177) target = $region36
        $region35: #{tpu_custom_call.1} parent=27 // pred_region
          %181 = dma.done %s173, 256
        $region36: #{tpu_custom_call.1} parent=27 // pred_fallthru
          _
        %s182 = sand.u32 %s30, 1
        %s183 = scalar_lea.sflag [#allocation3], %s182
        %s184 = sand.u32 %s30, 1
        %s185 = smul.addr %s184, 8
        %s186 = scalar_lea.vmem [#allocation2], %s185
        %p187 = pneg %p43
        %p188 = pneg %p40
        %s189 = sand.u32 %s56, 1
        %s190 = scalar_lea.sflag [#allocation6], %s189
        %s191 = sand.u32 %s56, 1
        %s192 = smul.addr %s191, 16
        %s193 = scalar_lea.vmem [#allocation5], %s192
        %p194 = pneg %p69
        %p195 = pneg %p66
        %p196 = pneg %p95
        %p197 = pneg %p92
        %s198 = sand.u32 %s82, 1
        %s199 = scalar_lea.sflag [#allocation4], %s198
        %s200 = sand.u32 %s82, 1
        %s201 = smul.addr %s200, 8
        %s202 = scalar_lea.vmem [#allocation7], %s201
        %v203 = vld [vmem:[%s166] sm:$0xff]
        %v204 = vld [vmem:[%s176] sm:$0xff]
        %v205 = vld [vmem:[%s176 + $0x8] sm:$0xff]
        %vm206 = vcmask 130048
        %v208 = vsel %vm206, %v203, 0
        %210 = vmatpush.msra.mxu0 0.0
        %211 = vmatpush.msra.mxu0 0.0
        %212 = vmatpush.msra.mxu0 0.0
        %213 = vmatpush.msra.mxu0 0.0
        %214 = vmatpush.msra.mxu0 0.0
        %215 = vmatpush.msra.mxu0 0.0
        %216 = vmatpush.msra.mxu0 0.0
        %217 = vmatpush.msra.mxu0 0.0
        %218 = vmatpush.msra.mxu0 0.0
        %219 = vmatpush.msra.mxu0 0.0
        %220 = vmatpush.msra.mxu0 0.0
        %221 = vmatpush.msra.mxu0 0.0
        %222 = vmatpush.msra.mxu0 0.0
        %223 = vmatpush.msra.mxu0 0.0
        %224 = vmatpush.msra.mxu0 %v205
        %225 = vmatpush.msra.mxu0 %v204
        %226 = vmatmul.f32.gmra.mxu0 %v208
        %v227 = vpop.f32.mrf.mxu0
        %v228 = vadd.f32 0.0, %v227
        %229 = vdwg.mxu0
        %vm230 = vcmask 261120
        %231 = vst.msk [vmem:[%s202] sm:$0xff] %vm230, %v228
        %s232 = sand.u32 %s82, 1
        %s233 = scalar_lea.sflag [#allocation4], %s232
        %s234 = sand.u32 %s82, 1
        %s235 = smul.addr %s234, 8
        %s236 = scalar_lea.vmem [#allocation7], %s235
        // Predicated region
        $region37: #{tpu_custom_call.1} parent=27 // pred_check
          %p237 = pneg %p92
        $region38: #{tpu_custom_call.1} parent=27 // pred_check_branch
          %239 = sbr.rel (%p237) target = $region40
        $region39: #{tpu_custom_call.1} parent=27 // pred_region
          %241 = vsyncadd %s233, 0
          %s242 = smul.addr %s22, 8
          %s243 = scalar_lea.hbm %s2, %s242
          %s245 = sshll.u32 %s236, 4
          %s246 = int_to_ptr.vmem [resolvable:$true] %s245
          %s247 = sshll.u32 %s243, 4
          %s248 = int_to_ptr.hbm [resolvable:$true] %s247
          %250 = dma.vmem_to_hbm [thread:$0]  %s246, 128, %s248, %s233
        $region40: #{tpu_custom_call.1} parent=27 // pred_fallthru
          _
      $region28: #{tpu_custom_call.1} parent=5 // pred_fallthru
        _
      %p251 = scmp.le.s32.totalorder 2, %s17
      // Predicated region
      $region41: #{tpu_custom_call.1} parent=5 // pred_check
        %p252 = pneg %p251
      $region42: #{tpu_custom_call.1} parent=5 // pred_check_branch
        %254 = sbr.rel (%p252) target = $region44
      $region43: #{tpu_custom_call.1} parent=5 // pred_region
        %s255 = ssub.s32 %s17, 2
        // Predicated region
        $region45: #{tpu_custom_call.1} parent=43 // pred_check
          %p256 = pneg %p98
        $region46: #{tpu_custom_call.1} parent=43 // pred_check_branch
          %258 = sbr.rel (%p256) target = $region48
        $region47: #{tpu_custom_call.1} parent=43 // pred_region
          %s259 = sand.u32 %s83, 1
          %s260 = scalar_lea.sflag [#allocation4], %s259
          %s261 = sand.u32 %s83, 1
          %s262 = smul.addr %s261, 8
          %s263 = scalar_lea.vmem [#allocation7], %s262
          %265 = dma.done %s260, 128
        $region48: #{tpu_custom_call.1} parent=43 // pred_fallthru
          _
      $region44: #{tpu_custom_call.1} parent=5 // pred_fallthru
        _
    $region6: #{tpu_custom_call.1} parent=1 // loop_footer
      %s21 = sadd.s32 1, %s17
    $region7: #{tpu_custom_call.1} parent=1 // loop_footer_branch
      %16 = sbr.rel target = $region3
    $region8: #{tpu_custom_call.1} parent=1 // loop_exit
      _
    %266 = vsyncpa [#allocation3], 1
    %s267 = scalar_lea.sflag [#allocation3], 1
    %268 = vsyncpa %s267, 1
    %269 = vsyncpa [#allocation6], 1
    %s270 = scalar_lea.sflag [#allocation6], 1
    %271 = vsyncpa %s270, 1
    %272 = vsyncpa [#allocation4], 1
    %s273 = scalar_lea.sflag [#allocation4], 1
    %274 = vsyncpa %s273, 1

</llo_original>
